<compile_context>
chip_gen: v7x
topology: tpu7x:2x2x1
jax: 0.10.0
libtpu: 0.0.40
codegen_flags: <defaults>
</compile_context>

<pallas_src>
import functools

import jax
import jax.numpy as jnp
from jax.experimental import pallas as pl
from jax.experimental.pallas import tpu as pltpu


def conv2d_kernel(x_ref, w_ref, b_ref, o_ref, *, W, KH, KW):
    """Shift-based (valid, stride-1) 2D conv on the VPU, spatial in lanes.

    x_ref: (N, Cin, HWP)            f32 VMEM  (flattened H*W, zero-padded to HWP)
    w_ref: (Cout*Cin*KH*KW,)        f32 SMEM  (torch OIHW flattened, scalars)
    b_ref: (Cout,)                  f32 SMEM  (scalars)
    o_ref: (N, Cout, OHW_PAD)       f32 VMEM  (lane-dense; OHW_PAD % 128 == 0,
                                               extra cols dropped in wrapper)
    """
    N, Cin, _ = x_ref.shape
    _, Cout, OHW = o_ref.shape

    for n in range(N):  # N == 1; fully unrolled
        # (Cout, OHW) accumulator as Cout rows of (1, OHW): 3 full vregs per
        # row at 384 lanes.  Bias folded into the init.
        acc = [jnp.full((1, OHW), b_ref[co], dtype=jnp.float32)
               for co in range(Cout)]
        for ci in range(Cin):
            for kh in range(KH):
                for kw in range(KW):
                    shift = kh * W + kw  # static lane offset
                    # One shifted window per tap, reused for all Cout rows.
                    win = x_ref[n, pl.ds(ci, 1), pl.ds(shift, OHW)]  # (1, OHW)
                    for co in range(Cout):
                        w_s = w_ref[((co * Cin + ci) * KH + kh) * KW + kw]
                        acc[co] = acc[co] + w_s * win  # scalar x vector FMA
        for co in range(Cout):
            o_ref[n, pl.ds(co, 1), :] = acc[co]


def conv2d_pallas(x_nchw, weight_oihw, bias):
    """NCHW in / NCHW out, same semantics as torch.nn.Conv2d(2, 3, (3, 3))."""
    N, Cin, H, W = x_nchw.shape
    Cout, _, KH, KW = weight_oihw.shape
    OH, OW = H - KH + 1, W - KW + 1

    OHW = OH * W                          # over-computed width (valid cols :OW)
    OHW_PAD = ((OHW + 127) // 128) * 128  # lane-dense: full, unmasked stores
    max_shift = (KH - 1) * W + (KW - 1)   # largest static tap shift
    HWP = OHW_PAD + max_shift             # minimal length so all slices fit

    # Free reshape (contiguous) + small zero-pad so every shifted slice is
    # in-bounds.  Padded values only ever reach discarded output columns.
    x_flat = x_nchw.reshape(N, Cin, H * W).astype(jnp.float32)
    if HWP > H * W:
        x_flat = jnp.pad(x_flat, ((0, 0), (0, 0), (0, HWP - H * W)))
    w_flat = weight_oihw.reshape(-1).astype(jnp.float32)   # OIHW flattened
    b_flat = bias.reshape(-1).astype(jnp.float32)

    kernel = functools.partial(conv2d_kernel, W=W, KH=KH, KW=KW)

    out_flat = pl.pallas_call(
        kernel,
        out_shape=jax.ShapeDtypeStruct((N, Cout, OHW_PAD), jnp.float32),
        in_specs=[
            pl.BlockSpec((N, Cin, HWP), lambda: (0, 0, 0)),          # VMEM
            pl.BlockSpec(memory_space=pltpu.MemorySpace.SMEM),       # weights
            pl.BlockSpec(memory_space=pltpu.MemorySpace.SMEM),       # bias
        ],
        out_specs=pl.BlockSpec((N, Cout, OHW_PAD), lambda: (0, 0, 0)),
        cost_estimate=pl.CostEstimate(
            flops=2 * N * Cout * Cin * KH * KW * OHW_PAD,
            transcendentals=0,
            bytes_accessed=4 * (N * Cin * HWP + w_flat.size + Cout
                                + N * Cout * OHW_PAD),
        ),
    )(x_flat, w_flat, b_flat)

    # Drop lane padding, free reshape, then drop the (KW-1) over-computed
    # columns per output row.  Result is already NCHW — no transpose needed.
    return out_flat[:, :, :OHW].reshape(N, Cout, OH, W)[:, :, :, :OW]


if __name__ == "__main__":
    key = jax.random.PRNGKey(0)
    k_x, k_w, k_b = jax.random.split(key, 3)

    # Module shapes: Conv2d(in=2, out=3, kernel=(3,3)); input (1, 2, 20, 20).
    x = jax.random.normal(k_x, (1, 2, 20, 20), dtype=jnp.float32)
    # Deterministic synthetic parameters (PyTorch-uniform-like, 1/sqrt(fan_in)).
    fan_in = 2 * 3 * 3
    bound = 1.0 / (fan_in ** 0.5)
    weight = jax.random.uniform(k_w, (3, 2, 3, 3), jnp.float32, -bound, bound)
    bias = jax.random.uniform(k_b, (3,), jnp.float32, -bound, bound)

    out = jax.jit(conv2d_pallas)(x, weight, bias)
    out = jax.block_until_ready(out)

    # Sanity check against XLA's conv (same NCHW/OIHW semantics as PyTorch).
    ref = jax.lax.conv_general_dilated(
        x, weight, window_strides=(1, 1), padding="VALID",
        dimension_numbers=("NCHW", "OIHW", "NCHW"),
    ) + bias.reshape(1, 3, 1, 1)
    assert out.shape == (1, 3, 18, 18), out.shape
    assert jnp.allclose(out, ref, atol=1e-4, rtol=1e-4)

    print("KERNEL_OK")
</pallas_src>

<mosaic_0001>
module attributes {stable_mosaic.version = 11 : i64} {
  func.func @conv2d_kernel(%arg0: memref<1x2x426xf32, #tpu.memory_space<vmem>>, %arg1: memref<54xf32, #tpu.memory_space<smem>>, %arg2: memref<3xf32, #tpu.memory_space<smem>>, %arg3: memref<1x3x384xf32, #tpu.memory_space<vmem>>) attributes {dimension_semantics = [], scalar_prefetch = 0 : i64, scratch_operands = 0 : i64, tpu.core_type = #tpu.core_type<tc>} {
    %c0 = arith.constant 0 : index
    %0 = memref.load %arg2[%c0] : memref<3xf32, #tpu.memory_space<smem>>
    %1 = vector.broadcast %0 : f32 to vector<1x384xf32>
    %c1 = arith.constant 1 : index
    %2 = memref.load %arg2[%c1] : memref<3xf32, #tpu.memory_space<smem>>
    %3 = vector.broadcast %2 : f32 to vector<1x384xf32>
    %c2 = arith.constant 2 : index
    %4 = memref.load %arg2[%c2] : memref<3xf32, #tpu.memory_space<smem>>
    %5 = vector.broadcast %4 : f32 to vector<1x384xf32>
    %c0_0 = arith.constant 0 : index
    %c0_1 = arith.constant 0 : index
    %c0_2 = arith.constant 0 : index
    %6 = vector.load %arg0[%c0_0, %c0_1, %c0_2] : memref<1x2x426xf32, #tpu.memory_space<vmem>>, vector<1x1x384xf32>
    %7 = vector.shape_cast %6 : vector<1x1x384xf32> to vector<1x384xf32>
    %c0_3 = arith.constant 0 : index
    %8 = memref.load %arg1[%c0_3] : memref<54xf32, #tpu.memory_space<smem>>
    %9 = vector.broadcast %8 : f32 to vector<1x384xf32>
    %10 = arith.mulf %9, %7 : vector<1x384xf32>
    %11 = arith.addf %1, %10 : vector<1x384xf32>
    %c18 = arith.constant 18 : index
    %12 = memref.load %arg1[%c18] : memref<54xf32, #tpu.memory_space<smem>>
    %13 = vector.broadcast %12 : f32 to vector<1x384xf32>
    %14 = arith.mulf %13, %7 : vector<1x384xf32>
    %15 = arith.addf %3, %14 : vector<1x384xf32>
    %c36 = arith.constant 36 : index
    %16 = memref.load %arg1[%c36] : memref<54xf32, #tpu.memory_space<smem>>
    %17 = vector.broadcast %16 : f32 to vector<1x384xf32>
    %18 = arith.mulf %17, %7 : vector<1x384xf32>
    %19 = arith.addf %5, %18 : vector<1x384xf32>
    %c0_4 = arith.constant 0 : index
    %c0_5 = arith.constant 0 : index
    %c1_6 = arith.constant 1 : index
    %20 = vector.load %arg0[%c0_4, %c0_5, %c1_6] : memref<1x2x426xf32, #tpu.memory_space<vmem>>, vector<1x1x384xf32>
    %21 = vector.shape_cast %20 : vector<1x1x384xf32> to vector<1x384xf32>
    %c1_7 = arith.constant 1 : index
    %22 = memref.load %arg1[%c1_7] : memref<54xf32, #tpu.memory_space<smem>>
    %23 = vector.broadcast %22 : f32 to vector<1x384xf32>
    %24 = arith.mulf %23, %21 : vector<1x384xf32>
    %25 = arith.addf %11, %24 : vector<1x384xf32>
    %c19 = arith.constant 19 : index
    %26 = memref.load %arg1[%c19] : memref<54xf32, #tpu.memory_space<smem>>
    %27 = vector.broadcast %26 : f32 to vector<1x384xf32>
    %28 = arith.mulf %27, %21 : vector<1x384xf32>
    %29 = arith.addf %15, %28 : vector<1x384xf32>
    %c37 = arith.constant 37 : index
    %30 = memref.load %arg1[%c37] : memref<54xf32, #tpu.memory_space<smem>>
    %31 = vector.broadcast %30 : f32 to vector<1x384xf32>
    %32 = arith.mulf %31, %21 : vector<1x384xf32>
    %33 = arith.addf %19, %32 : vector<1x384xf32>
    %c0_8 = arith.constant 0 : index
    %c0_9 = arith.constant 0 : index
    %c2_10 = arith.constant 2 : index
    %34 = vector.load %arg0[%c0_8, %c0_9, %c2_10] : memref<1x2x426xf32, #tpu.memory_space<vmem>>, vector<1x1x384xf32>
    %35 = vector.shape_cast %34 : vector<1x1x384xf32> to vector<1x384xf32>
    %c2_11 = arith.constant 2 : index
    %36 = memref.load %arg1[%c2_11] : memref<54xf32, #tpu.memory_space<smem>>
    %37 = vector.broadcast %36 : f32 to vector<1x384xf32>
    %38 = arith.mulf %37, %35 : vector<1x384xf32>
    %39 = arith.addf %25, %38 : vector<1x384xf32>
    %c20 = arith.constant 20 : index
    %40 = memref.load %arg1[%c20] : memref<54xf32, #tpu.memory_space<smem>>
    %41 = vector.broadcast %40 : f32 to vector<1x384xf32>
    %42 = arith.mulf %41, %35 : vector<1x384xf32>
    %43 = arith.addf %29, %42 : vector<1x384xf32>
    %c38 = arith.constant 38 : index
    %44 = memref.load %arg1[%c38] : memref<54xf32, #tpu.memory_space<smem>>
    %45 = vector.broadcast %44 : f32 to vector<1x384xf32>
    %46 = arith.mulf %45, %35 : vector<1x384xf32>
    %47 = arith.addf %33, %46 : vector<1x384xf32>
    %c0_12 = arith.constant 0 : index
    %c0_13 = arith.constant 0 : index
    %c20_14 = arith.constant 20 : index
    %48 = vector.load %arg0[%c0_12, %c0_13, %c20_14] : memref<1x2x426xf32, #tpu.memory_space<vmem>>, vector<1x1x384xf32>
    %49 = vector.shape_cast %48 : vector<1x1x384xf32> to vector<1x384xf32>
    %c3 = arith.constant 3 : index
    %50 = memref.load %arg1[%c3] : memref<54xf32, #tpu.memory_space<smem>>
    %51 = vector.broadcast %50 : f32 to vector<1x384xf32>
    %52 = arith.mulf %51, %49 : vector<1x384xf32>
    %53 = arith.addf %39, %52 : vector<1x384xf32>
    %c21 = arith.constant 21 : index
    %54 = memref.load %arg1[%c21] : memref<54xf32, #tpu.memory_space<smem>>
    %55 = vector.broadcast %54 : f32 to vector<1x384xf32>
    %56 = arith.mulf %55, %49 : vector<1x384xf32>
    %57 = arith.addf %43, %56 : vector<1x384xf32>
    %c39 = arith.constant 39 : index
    %58 = memref.load %arg1[%c39] : memref<54xf32, #tpu.memory_space<smem>>
    %59 = vector.broadcast %58 : f32 to vector<1x384xf32>
    %60 = arith.mulf %59, %49 : vector<1x384xf32>
    %61 = arith.addf %47, %60 : vector<1x384xf32>
    %c0_15 = arith.constant 0 : index
    %c0_16 = arith.constant 0 : index
    %c21_17 = arith.constant 21 : index
    %62 = vector.load %arg0[%c0_15, %c0_16, %c21_17] : memref<1x2x426xf32, #tpu.memory_space<vmem>>, vector<1x1x384xf32>
    %63 = vector.shape_cast %62 : vector<1x1x384xf32> to vector<1x384xf32>
    %c4 = arith.constant 4 : index
    %64 = memref.load %arg1[%c4] : memref<54xf32, #tpu.memory_space<smem>>
    %65 = vector.broadcast %64 : f32 to vector<1x384xf32>
    %66 = arith.mulf %65, %63 : vector<1x384xf32>
    %67 = arith.addf %53, %66 : vector<1x384xf32>
    %c22 = arith.constant 22 : index
    %68 = memref.load %arg1[%c22] : memref<54xf32, #tpu.memory_space<smem>>
    %69 = vector.broadcast %68 : f32 to vector<1x384xf32>
    %70 = arith.mulf %69, %63 : vector<1x384xf32>
    %71 = arith.addf %57, %70 : vector<1x384xf32>
    %c40 = arith.constant 40 : index
    %72 = memref.load %arg1[%c40] : memref<54xf32, #tpu.memory_space<smem>>
    %73 = vector.broadcast %72 : f32 to vector<1x384xf32>
    %74 = arith.mulf %73, %63 : vector<1x384xf32>
    %75 = arith.addf %61, %74 : vector<1x384xf32>
    %c0_18 = arith.constant 0 : index
    %c0_19 = arith.constant 0 : index
    %c22_20 = arith.constant 22 : index
    %76 = vector.load %arg0[%c0_18, %c0_19, %c22_20] : memref<1x2x426xf32, #tpu.memory_space<vmem>>, vector<1x1x384xf32>
    %77 = vector.shape_cast %76 : vector<1x1x384xf32> to vector<1x384xf32>
    %c5 = arith.constant 5 : index
    %78 = memref.load %arg1[%c5] : memref<54xf32, #tpu.memory_space<smem>>
    %79 = vector.broadcast %78 : f32 to vector<1x384xf32>
    %80 = arith.mulf %79, %77 : vector<1x384xf32>
    %81 = arith.addf %67, %80 : vector<1x384xf32>
    %c23 = arith.constant 23 : index
    %82 = memref.load %arg1[%c23] : memref<54xf32, #tpu.memory_space<smem>>
    %83 = vector.broadcast %82 : f32 to vector<1x384xf32>
    %84 = arith.mulf %83, %77 : vector<1x384xf32>
    %85 = arith.addf %71, %84 : vector<1x384xf32>
    %c41 = arith.constant 41 : index
    %86 = memref.load %arg1[%c41] : memref<54xf32, #tpu.memory_space<smem>>
    %87 = vector.broadcast %86 : f32 to vector<1x384xf32>
    %88 = arith.mulf %87, %77 : vector<1x384xf32>
    %89 = arith.addf %75, %88 : vector<1x384xf32>
    %c0_21 = arith.constant 0 : index
    %c0_22 = arith.constant 0 : index
    %c40_23 = arith.constant 40 : index
    %90 = vector.load %arg0[%c0_21, %c0_22, %c40_23] : memref<1x2x426xf32, #tpu.memory_space<vmem>>, vector<1x1x384xf32>
    %91 = vector.shape_cast %90 : vector<1x1x384xf32> to vector<1x384xf32>
    %c6 = arith.constant 6 : index
    %92 = memref.load %arg1[%c6] : memref<54xf32, #tpu.memory_space<smem>>
    %93 = vector.broadcast %92 : f32 to vector<1x384xf32>
    %94 = arith.mulf %93, %91 : vector<1x384xf32>
    %95 = arith.addf %81, %94 : vector<1x384xf32>
    %c24 = arith.constant 24 : index
    %96 = memref.load %arg1[%c24] : memref<54xf32, #tpu.memory_space<smem>>
    %97 = vector.broadcast %96 : f32 to vector<1x384xf32>
    %98 = arith.mulf %97, %91 : vector<1x384xf32>
    %99 = arith.addf %85, %98 : vector<1x384xf32>
    %c42 = arith.constant 42 : index
    %100 = memref.load %arg1[%c42] : memref<54xf32, #tpu.memory_space<smem>>
    %101 = vector.broadcast %100 : f32 to vector<1x384xf32>
    %102 = arith.mulf %101, %91 : vector<1x384xf32>
    %103 = arith.addf %89, %102 : vector<1x384xf32>
    %c0_24 = arith.constant 0 : index
    %c0_25 = arith.constant 0 : index
    %c41_26 = arith.constant 41 : index
    %104 = vector.load %arg0[%c0_24, %c0_25, %c41_26] : memref<1x2x426xf32, #tpu.memory_space<vmem>>, vector<1x1x384xf32>
    %105 = vector.shape_cast %104 : vector<1x1x384xf32> to vector<1x384xf32>
    %c7 = arith.constant 7 : index
    %106 = memref.load %arg1[%c7] : memref<54xf32, #tpu.memory_space<smem>>
    %107 = vector.broadcast %106 : f32 to vector<1x384xf32>
    %108 = arith.mulf %107, %105 : vector<1x384xf32>
    %109 = arith.addf %95, %108 : vector<1x384xf32>
    %c25 = arith.constant 25 : index
    %110 = memref.load %arg1[%c25] : memref<54xf32, #tpu.memory_space<smem>>
    %111 = vector.broadcast %110 : f32 to vector<1x384xf32>
    %112 = arith.mulf %111, %105 : vector<1x384xf32>
    %113 = arith.addf %99, %112 : vector<1x384xf32>
    %c43 = arith.constant 43 : index
    %114 = memref.load %arg1[%c43] : memref<54xf32, #tpu.memory_space<smem>>
    %115 = vector.broadcast %114 : f32 to vector<1x384xf32>
    %116 = arith.mulf %115, %105 : vector<1x384xf32>
    %117 = arith.addf %103, %116 : vector<1x384xf32>
    %c0_27 = arith.constant 0 : index
    %c0_28 = arith.constant 0 : index
    %c42_29 = arith.constant 42 : index
    %118 = vector.load %arg0[%c0_27, %c0_28, %c42_29] : memref<1x2x426xf32, #tpu.memory_space<vmem>>, vector<1x1x384xf32>
    %119 = vector.shape_cast %118 : vector<1x1x384xf32> to vector<1x384xf32>
    %c8 = arith.constant 8 : index
    %120 = memref.load %arg1[%c8] : memref<54xf32, #tpu.memory_space<smem>>
    %121 = vector.broadcast %120 : f32 to vector<1x384xf32>
    %122 = arith.mulf %121, %119 : vector<1x384xf32>
    %123 = arith.addf %109, %122 : vector<1x384xf32>
    %c26 = arith.constant 26 : index
    %124 = memref.load %arg1[%c26] : memref<54xf32, #tpu.memory_space<smem>>
    %125 = vector.broadcast %124 : f32 to vector<1x384xf32>
    %126 = arith.mulf %125, %119 : vector<1x384xf32>
    %127 = arith.addf %113, %126 : vector<1x384xf32>
    %c44 = arith.constant 44 : index
    %128 = memref.load %arg1[%c44] : memref<54xf32, #tpu.memory_space<smem>>
    %129 = vector.broadcast %128 : f32 to vector<1x384xf32>
    %130 = arith.mulf %129, %119 : vector<1x384xf32>
    %131 = arith.addf %117, %130 : vector<1x384xf32>
    %c0_30 = arith.constant 0 : index
    %c1_31 = arith.constant 1 : index
    %c0_32 = arith.constant 0 : index
    %132 = vector.load %arg0[%c0_30, %c1_31, %c0_32] : memref<1x2x426xf32, #tpu.memory_space<vmem>>, vector<1x1x384xf32>
    %133 = vector.shape_cast %132 : vector<1x1x384xf32> to vector<1x384xf32>
    %c9 = arith.constant 9 : index
    %134 = memref.load %arg1[%c9] : memref<54xf32, #tpu.memory_space<smem>>
    %135 = vector.broadcast %134 : f32 to vector<1x384xf32>
    %136 = arith.mulf %135, %133 : vector<1x384xf32>
    %137 = arith.addf %123, %136 : vector<1x384xf32>
    %c27 = arith.constant 27 : index
    %138 = memref.load %arg1[%c27] : memref<54xf32, #tpu.memory_space<smem>>
    %139 = vector.broadcast %138 : f32 to vector<1x384xf32>
    %140 = arith.mulf %139, %133 : vector<1x384xf32>
    %141 = arith.addf %127, %140 : vector<1x384xf32>
    %c45 = arith.constant 45 : index
    %142 = memref.load %arg1[%c45] : memref<54xf32, #tpu.memory_space<smem>>
    %143 = vector.broadcast %142 : f32 to vector<1x384xf32>
    %144 = arith.mulf %143, %133 : vector<1x384xf32>
    %145 = arith.addf %131, %144 : vector<1x384xf32>
    %c0_33 = arith.constant 0 : index
    %c1_34 = arith.constant 1 : index
    %c1_35 = arith.constant 1 : index
    %146 = vector.load %arg0[%c0_33, %c1_34, %c1_35] : memref<1x2x426xf32, #tpu.memory_space<vmem>>, vector<1x1x384xf32>
    %147 = vector.shape_cast %146 : vector<1x1x384xf32> to vector<1x384xf32>
    %c10 = arith.constant 10 : index
    %148 = memref.load %arg1[%c10] : memref<54xf32, #tpu.memory_space<smem>>
    %149 = vector.broadcast %148 : f32 to vector<1x384xf32>
    %150 = arith.mulf %149, %147 : vector<1x384xf32>
    %151 = arith.addf %137, %150 : vector<1x384xf32>
    %c28 = arith.constant 28 : index
    %152 = memref.load %arg1[%c28] : memref<54xf32, #tpu.memory_space<smem>>
    %153 = vector.broadcast %152 : f32 to vector<1x384xf32>
    %154 = arith.mulf %153, %147 : vector<1x384xf32>
    %155 = arith.addf %141, %154 : vector<1x384xf32>
    %c46 = arith.constant 46 : index
    %156 = memref.load %arg1[%c46] : memref<54xf32, #tpu.memory_space<smem>>
    %157 = vector.broadcast %156 : f32 to vector<1x384xf32>
    %158 = arith.mulf %157, %147 : vector<1x384xf32>
    %159 = arith.addf %145, %158 : vector<1x384xf32>
    %c0_36 = arith.constant 0 : index
    %c1_37 = arith.constant 1 : index
    %c2_38 = arith.constant 2 : index
    %160 = vector.load %arg0[%c0_36, %c1_37, %c2_38] : memref<1x2x426xf32, #tpu.memory_space<vmem>>, vector<1x1x384xf32>
    %161 = vector.shape_cast %160 : vector<1x1x384xf32> to vector<1x384xf32>
    %c11 = arith.constant 11 : index
    %162 = memref.load %arg1[%c11] : memref<54xf32, #tpu.memory_space<smem>>
    %163 = vector.broadcast %162 : f32 to vector<1x384xf32>
    %164 = arith.mulf %163, %161 : vector<1x384xf32>
    %165 = arith.addf %151, %164 : vector<1x384xf32>
    %c29 = arith.constant 29 : index
    %166 = memref.load %arg1[%c29] : memref<54xf32, #tpu.memory_space<smem>>
    %167 = vector.broadcast %166 : f32 to vector<1x384xf32>
    %168 = arith.mulf %167, %161 : vector<1x384xf32>
    %169 = arith.addf %155, %168 : vector<1x384xf32>
    %c47 = arith.constant 47 : index
    %170 = memref.load %arg1[%c47] : memref<54xf32, #tpu.memory_space<smem>>
    %171 = vector.broadcast %170 : f32 to vector<1x384xf32>
    %172 = arith.mulf %171, %161 : vector<1x384xf32>
    %173 = arith.addf %159, %172 : vector<1x384xf32>
    %c0_39 = arith.constant 0 : index
    %c1_40 = arith.constant 1 : index
    %c20_41 = arith.constant 20 : index
    %174 = vector.load %arg0[%c0_39, %c1_40, %c20_41] : memref<1x2x426xf32, #tpu.memory_space<vmem>>, vector<1x1x384xf32>
    %175 = vector.shape_cast %174 : vector<1x1x384xf32> to vector<1x384xf32>
    %c12 = arith.constant 12 : index
    %176 = memref.load %arg1[%c12] : memref<54xf32, #tpu.memory_space<smem>>
    %177 = vector.broadcast %176 : f32 to vector<1x384xf32>
    %178 = arith.mulf %177, %175 : vector<1x384xf32>
    %179 = arith.addf %165, %178 : vector<1x384xf32>
    %c30 = arith.constant 30 : index
    %180 = memref.load %arg1[%c30] : memref<54xf32, #tpu.memory_space<smem>>
    %181 = vector.broadcast %180 : f32 to vector<1x384xf32>
    %182 = arith.mulf %181, %175 : vector<1x384xf32>
    %183 = arith.addf %169, %182 : vector<1x384xf32>
    %c48 = arith.constant 48 : index
    %184 = memref.load %arg1[%c48] : memref<54xf32, #tpu.memory_space<smem>>
    %185 = vector.broadcast %184 : f32 to vector<1x384xf32>
    %186 = arith.mulf %185, %175 : vector<1x384xf32>
    %187 = arith.addf %173, %186 : vector<1x384xf32>
    %c0_42 = arith.constant 0 : index
    %c1_43 = arith.constant 1 : index
    %c21_44 = arith.constant 21 : index
    %188 = vector.load %arg0[%c0_42, %c1_43, %c21_44] : memref<1x2x426xf32, #tpu.memory_space<vmem>>, vector<1x1x384xf32>
    %189 = vector.shape_cast %188 : vector<1x1x384xf32> to vector<1x384xf32>
    %c13 = arith.constant 13 : index
    %190 = memref.load %arg1[%c13] : memref<54xf32, #tpu.memory_space<smem>>
    %191 = vector.broadcast %190 : f32 to vector<1x384xf32>
    %192 = arith.mulf %191, %189 : vector<1x384xf32>
    %193 = arith.addf %179, %192 : vector<1x384xf32>
    %c31 = arith.constant 31 : index
    %194 = memref.load %arg1[%c31] : memref<54xf32, #tpu.memory_space<smem>>
    %195 = vector.broadcast %194 : f32 to vector<1x384xf32>
    %196 = arith.mulf %195, %189 : vector<1x384xf32>
    %197 = arith.addf %183, %196 : vector<1x384xf32>
    %c49 = arith.constant 49 : index
    %198 = memref.load %arg1[%c49] : memref<54xf32, #tpu.memory_space<smem>>
    %199 = vector.broadcast %198 : f32 to vector<1x384xf32>
    %200 = arith.mulf %199, %189 : vector<1x384xf32>
    %201 = arith.addf %187, %200 : vector<1x384xf32>
    %c0_45 = arith.constant 0 : index
    %c1_46 = arith.constant 1 : index
    %c22_47 = arith.constant 22 : index
    %202 = vector.load %arg0[%c0_45, %c1_46, %c22_47] : memref<1x2x426xf32, #tpu.memory_space<vmem>>, vector<1x1x384xf32>
    %203 = vector.shape_cast %202 : vector<1x1x384xf32> to vector<1x384xf32>
    %c14 = arith.constant 14 : index
    %204 = memref.load %arg1[%c14] : memref<54xf32, #tpu.memory_space<smem>>
    %205 = vector.broadcast %204 : f32 to vector<1x384xf32>
    %206 = arith.mulf %205, %203 : vector<1x384xf32>
    %207 = arith.addf %193, %206 : vector<1x384xf32>
    %c32 = arith.constant 32 : index
    %208 = memref.load %arg1[%c32] : memref<54xf32, #tpu.memory_space<smem>>
    %209 = vector.broadcast %208 : f32 to vector<1x384xf32>
    %210 = arith.mulf %209, %203 : vector<1x384xf32>
    %211 = arith.addf %197, %210 : vector<1x384xf32>
    %c50 = arith.constant 50 : index
    %212 = memref.load %arg1[%c50] : memref<54xf32, #tpu.memory_space<smem>>
    %213 = vector.broadcast %212 : f32 to vector<1x384xf32>
    %214 = arith.mulf %213, %203 : vector<1x384xf32>
    %215 = arith.addf %201, %214 : vector<1x384xf32>
    %c0_48 = arith.constant 0 : index
    %c1_49 = arith.constant 1 : index
    %c40_50 = arith.constant 40 : index
    %216 = vector.load %arg0[%c0_48, %c1_49, %c40_50] : memref<1x2x426xf32, #tpu.memory_space<vmem>>, vector<1x1x384xf32>
    %217 = vector.shape_cast %216 : vector<1x1x384xf32> to vector<1x384xf32>
    %c15 = arith.constant 15 : index
    %218 = memref.load %arg1[%c15] : memref<54xf32, #tpu.memory_space<smem>>
    %219 = vector.broadcast %218 : f32 to vector<1x384xf32>
    %220 = arith.mulf %219, %217 : vector<1x384xf32>
    %221 = arith.addf %207, %220 : vector<1x384xf32>
    %c33 = arith.constant 33 : index
    %222 = memref.load %arg1[%c33] : memref<54xf32, #tpu.memory_space<smem>>
    %223 = vector.broadcast %222 : f32 to vector<1x384xf32>
    %224 = arith.mulf %223, %217 : vector<1x384xf32>
    %225 = arith.addf %211, %224 : vector<1x384xf32>
    %c51 = arith.constant 51 : index
    %226 = memref.load %arg1[%c51] : memref<54xf32, #tpu.memory_space<smem>>
    %227 = vector.broadcast %226 : f32 to vector<1x384xf32>
    %228 = arith.mulf %227, %217 : vector<1x384xf32>
    %229 = arith.addf %215, %228 : vector<1x384xf32>
    %c0_51 = arith.constant 0 : index
    %c1_52 = arith.constant 1 : index
    %c41_53 = arith.constant 41 : index
    %230 = vector.load %arg0[%c0_51, %c1_52, %c41_53] : memref<1x2x426xf32, #tpu.memory_space<vmem>>, vector<1x1x384xf32>
    %231 = vector.shape_cast %230 : vector<1x1x384xf32> to vector<1x384xf32>
    %c16 = arith.constant 16 : index
    %232 = memref.load %arg1[%c16] : memref<54xf32, #tpu.memory_space<smem>>
    %233 = vector.broadcast %232 : f32 to vector<1x384xf32>
    %234 = arith.mulf %233, %231 : vector<1x384xf32>
    %235 = arith.addf %221, %234 : vector<1x384xf32>
    %c34 = arith.constant 34 : index
    %236 = memref.load %arg1[%c34] : memref<54xf32, #tpu.memory_space<smem>>
    %237 = vector.broadcast %236 : f32 to vector<1x384xf32>
    %238 = arith.mulf %237, %231 : vector<1x384xf32>
    %239 = arith.addf %225, %238 : vector<1x384xf32>
    %c52 = arith.constant 52 : index
    %240 = memref.load %arg1[%c52] : memref<54xf32, #tpu.memory_space<smem>>
    %241 = vector.broadcast %240 : f32 to vector<1x384xf32>
    %242 = arith.mulf %241, %231 : vector<1x384xf32>
    %243 = arith.addf %229, %242 : vector<1x384xf32>
    %c0_54 = arith.constant 0 : index
    %c1_55 = arith.constant 1 : index
    %c42_56 = arith.constant 42 : index
    %244 = vector.load %arg0[%c0_54, %c1_55, %c42_56] : memref<1x2x426xf32, #tpu.memory_space<vmem>>, vector<1x1x384xf32>
    %245 = vector.shape_cast %244 : vector<1x1x384xf32> to vector<1x384xf32>
    %c17 = arith.constant 17 : index
    %246 = memref.load %arg1[%c17] : memref<54xf32, #tpu.memory_space<smem>>
    %247 = vector.broadcast %246 : f32 to vector<1x384xf32>
    %248 = arith.mulf %247, %245 : vector<1x384xf32>
    %249 = arith.addf %235, %248 : vector<1x384xf32>
    %c35 = arith.constant 35 : index
    %250 = memref.load %arg1[%c35] : memref<54xf32, #tpu.memory_space<smem>>
    %251 = vector.broadcast %250 : f32 to vector<1x384xf32>
    %252 = arith.mulf %251, %245 : vector<1x384xf32>
    %253 = arith.addf %239, %252 : vector<1x384xf32>
    %c53 = arith.constant 53 : index
    %254 = memref.load %arg1[%c53] : memref<54xf32, #tpu.memory_space<smem>>
    %255 = vector.broadcast %254 : f32 to vector<1x384xf32>
    %256 = arith.mulf %255, %245 : vector<1x384xf32>
    %257 = arith.addf %243, %256 : vector<1x384xf32>
    %c0_57 = arith.constant 0 : index
    %c0_58 = arith.constant 0 : index
    %c0_59 = arith.constant 0 : index
    %258 = vector.load %arg3[%c0_57, %c0_58, %c0_59] : memref<1x3x384xf32, #tpu.memory_space<vmem>>, vector<1x1x384xf32>
    %259 = vector.shape_cast %258 : vector<1x1x384xf32> to vector<1x384xf32>
    %260 = vector.shape_cast %249 : vector<1x384xf32> to vector<1x1x384xf32>
    tpu.vector_store %arg3[%c0_57, %c0_58, %c0_59], %260 {strides = array<i32>} : memref<1x3x384xf32, #tpu.memory_space<vmem>>, vector<1x1x384xf32>,
    %c0_60 = arith.constant 0 : index
    %c1_61 = arith.constant 1 : index
    %c0_62 = arith.constant 0 : index
    %261 = vector.load %arg3[%c0_60, %c1_61, %c0_62] : memref<1x3x384xf32, #tpu.memory_space<vmem>>, vector<1x1x384xf32>
    %262 = vector.shape_cast %261 : vector<1x1x384xf32> to vector<1x384xf32>
    %263 = vector.shape_cast %253 : vector<1x384xf32> to vector<1x1x384xf32>
    tpu.vector_store %arg3[%c0_60, %c1_61, %c0_62], %263 {strides = array<i32>} : memref<1x3x384xf32, #tpu.memory_space<vmem>>, vector<1x1x384xf32>,
    %c0_63 = arith.constant 0 : index
    %c2_64 = arith.constant 2 : index
    %c0_65 = arith.constant 0 : index
    %264 = vector.load %arg3[%c0_63, %c2_64, %c0_65] : memref<1x3x384xf32, #tpu.memory_space<vmem>>, vector<1x1x384xf32>
    %265 = vector.shape_cast %264 : vector<1x1x384xf32> to vector<1x384xf32>
    %266 = vector.shape_cast %257 : vector<1x384xf32> to vector<1x1x384xf32>
    tpu.vector_store %arg3[%c0_63, %c2_64, %c0_65], %266 {strides = array<i32>} : memref<1x3x384xf32, #tpu.memory_space<vmem>>, vector<1x1x384xf32>,
    return
  }
}

</mosaic_0001>

<llo_original>
// kernel: conv2d_pallas.1
$region0: #{conv2d_pallas.1}
  #allocation0 [shape = 'u32[]', space=smem, size = 0x4, offset = 0x4, fixed_abs, tag = 'smem constant byte address 0x4 - core index']
  #allocation1 [shape = 'u32[144,128]{1,0:T(1,128)}', space=vmem, size = 0x12000, scoped, tag = 'internal scratch']
  %s0 = inlined_call_operand.vmem [shape: f32[1,2,426], index: 0, kind: input, shape index: {}]
  %s1 = inlined_call_operand.vmem [shape: f32[54], index: 1, kind: input, shape index: {}]
  %s2 = inlined_call_operand.vmem [shape: f32[3], index: 2, kind: input, shape index: {}]
  %s3 = inlined_call_operand.vmem [shape: f32[1,3,384], index: 3, kind: output, shape index: {}]
  %s4 = sld [smem:[#allocation0]]
  $region30: #{conv2d_pallas.1} parent=0
    _
  %s6 = ssub.s32 1, %s4
  %s7 = scalar_select 0, %s6, %s4
  $region1: #{conv2d_pallas.1} parent=0
    #allocation2 [shape = 'u8[512]{0}', space=smem, size = 0x200, scoped, tag = 'input window, operand 1, single buffered']
    #allocation3 [shape = 's32[1]{0}', space=sflag, size = 0x4, scoped, tag = 'scoped memory for conv2d_pallas.1']
    #allocation4 [shape = 'u8[512]{0}', space=smem, size = 0x200, scoped, tag = 'input window, operand 2, single buffered']
    #allocation5 [shape = 's32[1]{0}', space=sflag, size = 0x4, scoped, tag = 'scoped memory for conv2d_pallas.1']
    %8 = vsyncpa [#allocation3], 0
    %9 = vsyncpa [#allocation5], 0
    // Predicated region
    $region2: #{conv2d_pallas.1} parent=1 // pred_check
      _
    $region3: #{conv2d_pallas.1} parent=1 // pred_check_branch
      %11 = sbr.rel (0) target = $region5
    $region4: #{conv2d_pallas.1} parent=1 // pred_region
      _
    $region5: #{conv2d_pallas.1} parent=1 // pred_fallthru
      _
    // Predicated region
    $region6: #{conv2d_pallas.1} parent=1 // pred_check
      _
    $region7: #{conv2d_pallas.1} parent=1 // pred_check_branch
      %13 = sbr.rel (0) target = $region9
    $region8: #{conv2d_pallas.1} parent=1 // pred_region
      %s15 = ssub.s32 16, 16
      %16 = vsyncadd [#allocation3], %s15
      %s18 = sshll.u32 %s1, 4
      %s19 = int_to_ptr.vmem [resolvable:$true] %s18
      %21 = dma.vmem_to_smem %s19, 16, [#allocation2], [#allocation3]
    $region9: #{conv2d_pallas.1} parent=1 // pred_fallthru
      _
    // Predicated region
    $region10: #{conv2d_pallas.1} parent=1 // pred_check
      _
    $region11: #{conv2d_pallas.1} parent=1 // pred_check_branch
      %23 = sbr.rel (0) target = $region13
    $region12: #{conv2d_pallas.1} parent=1 // pred_region
      %s25 = ssub.s32 16, 16
      %26 = vsyncadd [#allocation5], %s25
      %s28 = sshll.u32 %s2, 4
      %s29 = int_to_ptr.vmem [resolvable:$true] %s28
      %31 = dma.vmem_to_smem %s29, 16, [#allocation4], [#allocation5]
    $region13: #{conv2d_pallas.1} parent=1 // pred_fallthru
      _
    // Predicated region
    $region14: #{conv2d_pallas.1} parent=1 // pred_check
      _
    $region15: #{conv2d_pallas.1} parent=1 // pred_check_branch
      %33 = sbr.rel (0) target = $region17
    $region16: #{conv2d_pallas.1} parent=1 // pred_region
      %34 = dma.done [#allocation3], 16
    $region17: #{conv2d_pallas.1} parent=1 // pred_fallthru
      _
    // Predicated region
    $region18: #{conv2d_pallas.1} parent=1 // pred_check
      _
    $region19: #{conv2d_pallas.1} parent=1 // pred_check_branch
      %36 = sbr.rel (0) target = $region21
    $region20: #{conv2d_pallas.1} parent=1 // pred_region
      %37 = dma.done [#allocation5], 16
    $region21: #{conv2d_pallas.1} parent=1 // pred_fallthru
      _
    %38 = sfence
    %s39 = sld [smem:[#allocation4]]
    %v40 = vstv %s39
    %s41 = sld [smem:[#allocation4 + $0x1]]
    %v42 = vstv %s41
    %s43 = sld [smem:[#allocation4 + $0x2]]
    %v44 = vstv %s43
    %v45 = vld [vmem:[%s0] ss:$2 sm:$0x7]
    %s46 = sld [smem:[#allocation2]]
    %v47 = vstv %s46
    %v48 = vmul.f32 %v47, %v45
    %v49 = vadd.f32 %v40, %v48
    %s50 = sld [smem:[#allocation2 + $0x12]]
    %v51 = vstv %s50
    %v52 = vmul.f32 %v51, %v45
    %v53 = vadd.f32 %v42, %v52
    %s54 = sld [smem:[#allocation2 + $0x24]]
    %v55 = vstv %s54
    %v56 = vmul.f32 %v55, %v45
    %v57 = vadd.f32 %v44, %v56
    %v58 = vld [vmem:[%s0] ss:$2 sm:$0xf]
    %s59 = sld [smem:[#allocation2 + $0x1]]
    %v60 = vstv %s59
    %v61 = vmul.f32 %v60, %v58
    %63 = vrot.lane.b32.xlu0 %v61, 127
    %v64 = vpop.permute.xlu0 %63
    %v65 = vrot.slane %v64, 1
    %vm66 = vcmask 1039360
    %v67 = vsel %vm66, %v64, %v65
    %v69 = vadd.f32 %v49, %v67
    %s70 = sld [smem:[#allocation2 + $0x13]]
    %v71 = vstv %s70
    %v72 = vmul.f32 %v71, %v58
    %74 = vrot.lane.b32.xlu0 %v72, 127
    %v75 = vpop.permute.xlu0 %74
    %v76 = vrot.slane %v75, 1
    %v77 = vsel %vm66, %v75, %v76
    %v79 = vadd.f32 %v53, %v77
    %s80 = sld [smem:[#allocation2 + $0x25]]
    %v81 = vstv %s80
    %v82 = vmul.f32 %v81, %v58
    %84 = vrot.lane.b32.xlu0 %v82, 127
    %v85 = vpop.permute.xlu0 %84
    %v86 = vrot.slane %v85, 1
    %v87 = vsel %vm66, %v85, %v86
    %v89 = vadd.f32 %v57, %v87
    %s90 = sld [smem:[#allocation2 + $0x2]]
    %v91 = vstv %s90
    %v92 = vmul.f32 %v91, %v58
    %94 = vrot.lane.b32.xlu0 %v92, 126
    %v95 = vpop.permute.xlu0 %94
    %v96 = vrot.slane %v95, 1
    %vm97 = vcmask 1031168
    %v98 = vsel %vm97, %v95, %v96
    %v100 = vadd.f32 %v69, %v98
    %s101 = sld [smem:[#allocation2 + $0x14]]
    %v102 = vstv %s101
    %v103 = vmul.f32 %v102, %v58
    %105 = vrot.lane.b32.xlu0 %v103, 126
    %v106 = vpop.permute.xlu0 %105
    %v107 = vrot.slane %v106, 1
    %v108 = vsel %vm97, %v106, %v107
    %v110 = vadd.f32 %v79, %v108
    %s111 = sld [smem:[#allocation2 + $0x26]]
    %v112 = vstv %s111
    %v113 = vmul.f32 %v112, %v58
    %115 = vrot.lane.b32.xlu0 %v113, 126
    %v116 = vpop.permute.xlu0 %115
    %v117 = vrot.slane %v116, 1
    %v118 = vsel %vm97, %v116, %v117
    %v120 = vadd.f32 %v89, %v118
    %s121 = sld [smem:[#allocation2 + $0x3]]
    %v122 = vstv %s121
    %v123 = vmul.f32 %v122, %v58
    %125 = vrot.lane.b32.xlu0 %v123, 108
    %v126 = vpop.permute.xlu0 %125
    %v127 = vrot.slane %v126, 1
    %vm128 = vcmask 883712
    %v129 = vsel %vm128, %v126, %v127
    %v131 = vadd.f32 %v100, %v129
    %s132 = sld [smem:[#allocation2 + $0x15]]
    %v133 = vstv %s132
    %v134 = vmul.f32 %v133, %v58
    %136 = vrot.lane.b32.xlu0 %v134, 108
    %v137 = vpop.permute.xlu0 %136
    %v138 = vrot.slane %v137, 1
    %v139 = vsel %vm128, %v137, %v138
    %v141 = vadd.f32 %v110, %v139
    %s142 = sld [smem:[#allocation2 + $0x27]]
    %v143 = vstv %s142
    %v144 = vmul.f32 %v143, %v58
    %146 = vrot.lane.b32.xlu0 %v144, 108
    %v147 = vpop.permute.xlu0 %146
    %v148 = vrot.slane %v147, 1
    %v149 = vsel %vm128, %v147, %v148
    %v151 = vadd.f32 %v120, %v149
    %s152 = sld [smem:[#allocation2 + $0x4]]
    %v153 = vstv %s152
    %v154 = vmul.f32 %v153, %v58
    %156 = vrot.lane.b32.xlu0 %v154, 107
    %v157 = vpop.permute.xlu0 %156
    %v158 = vrot.slane %v157, 1
    %vm159 = vcmask 875520
    %v160 = vsel %vm159, %v157, %v158
    %v162 = vadd.f32 %v131, %v160
    %s163 = sld [smem:[#allocation2 + $0x16]]
    %v164 = vstv %s163
    %v165 = vmul.f32 %v164, %v58
    %167 = vrot.lane.b32.xlu0 %v165, 107
    %v168 = vpop.permute.xlu0 %167
    %v169 = vrot.slane %v168, 1
    %v170 = vsel %vm159, %v168, %v169
    %v172 = vadd.f32 %v141, %v170
    %s173 = sld [smem:[#allocation2 + $0x28]]
    %v174 = vstv %s173
    %v175 = vmul.f32 %v174, %v58
    %177 = vrot.lane.b32.xlu0 %v175, 107
    %v178 = vpop.permute.xlu0 %177
    %v179 = vrot.slane %v178, 1
    %v180 = vsel %vm159, %v178, %v179
    %v182 = vadd.f32 %v151, %v180
    %s183 = sld [smem:[#allocation2 + $0x5]]
    %v184 = vstv %s183
    %v185 = vmul.f32 %v184, %v58
    %187 = vrot.lane.b32.xlu0 %v185, 106
    %v188 = vpop.permute.xlu0 %187
    %v189 = vrot.slane %v188, 1
    %vm190 = vcmask 867328
    %v191 = vsel %vm190, %v188, %v189
    %v193 = vadd.f32 %v162, %v191
    %s194 = sld [smem:[#allocation2 + $0x17]]
    %v195 = vstv %s194
    %v196 = vmul.f32 %v195, %v58
    %198 = vrot.lane.b32.xlu0 %v196, 106
    %v199 = vpop.permute.xlu0 %198
    %v200 = vrot.slane %v199, 1
    %v201 = vsel %vm190, %v199, %v200
    %v203 = vadd.f32 %v172, %v201
    %s204 = sld [smem:[#allocation2 + $0x29]]
    %v205 = vstv %s204
    %v206 = vmul.f32 %v205, %v58
    %208 = vrot.lane.b32.xlu0 %v206, 106
    %v209 = vpop.permute.xlu0 %208
    %v210 = vrot.slane %v209, 1
    %v211 = vsel %vm190, %v209, %v210
    %v213 = vadd.f32 %v182, %v211
    %s214 = sld [smem:[#allocation2 + $0x6]]
    %v215 = vstv %s214
    %v216 = vmul.f32 %v215, %v58
    %218 = vrot.lane.b32.xlu0 %v216, 88
    %v219 = vpop.permute.xlu0 %218
    %v220 = vrot.slane %v219, 1
    %vm221 = vcmask 719872
    %v222 = vsel %vm221, %v219, %v220
    %v224 = vadd.f32 %v193, %v222
    %s225 = sld [smem:[#allocation2 + $0x18]]
    %v226 = vstv %s225
    %v227 = vmul.f32 %v226, %v58
    %229 = vrot.lane.b32.xlu0 %v227, 88
    %v230 = vpop.permute.xlu0 %229
    %v231 = vrot.slane %v230, 1
    %v232 = vsel %vm221, %v230, %v231
    %v234 = vadd.f32 %v203, %v232
    %s235 = sld [smem:[#allocation2 + $0x2a]]
    %v236 = vstv %s235
    %v237 = vmul.f32 %v236, %v58
    %239 = vrot.lane.b32.xlu0 %v237, 88
    %v240 = vpop.permute.xlu0 %239
    %v241 = vrot.slane %v240, 1
    %v242 = vsel %vm221, %v240, %v241
    %v244 = vadd.f32 %v213, %v242
    %s245 = sld [smem:[#allocation2 + $0x7]]
    %v246 = vstv %s245
    %v247 = vmul.f32 %v246, %v58
    %249 = vrot.lane.b32.xlu0 %v247, 87
    %v250 = vpop.permute.xlu0 %249
    %v251 = vrot.slane %v250, 1
    %vm252 = vcmask 711680
    %v253 = vsel %vm252, %v250, %v251
    %v255 = vadd.f32 %v224, %v253
    %s256 = sld [smem:[#allocation2 + $0x19]]
    %v257 = vstv %s256
    %v258 = vmul.f32 %v257, %v58
    %260 = vrot.lane.b32.xlu0 %v258, 87
    %v261 = vpop.permute.xlu0 %260
    %v262 = vrot.slane %v261, 1
    %v263 = vsel %vm252, %v261, %v262
    %v265 = vadd.f32 %v234, %v263
    %s266 = sld [smem:[#allocation2 + $0x2b]]
    %v267 = vstv %s266
    %v268 = vmul.f32 %v267, %v58
    %270 = vrot.lane.b32.xlu0 %v268, 87
    %v271 = vpop.permute.xlu0 %270
    %v272 = vrot.slane %v271, 1
    %v273 = vsel %vm252, %v271, %v272
    %v275 = vadd.f32 %v244, %v273
    %s276 = sld [smem:[#allocation2 + $0x8]]
    %v277 = vstv %s276
    %v278 = vmul.f32 %v277, %v58
    %280 = vrot.lane.b32.xlu0 %v278, 86
    %v281 = vpop.permute.xlu0 %280
    %v282 = vrot.slane %v281, 1
    %vm283 = vcmask 703488
    %v284 = vsel %vm283, %v281, %v282
    %v286 = vadd.f32 %v255, %v284
    %s287 = sld [smem:[#allocation2 + $0x1a]]
    %v288 = vstv %s287
    %v289 = vmul.f32 %v288, %v58
    %291 = vrot.lane.b32.xlu0 %v289, 86
    %v292 = vpop.permute.xlu0 %291
    %v293 = vrot.slane %v292, 1
    %v294 = vsel %vm283, %v292, %v293
    %v296 = vadd.f32 %v265, %v294
    %s297 = sld [smem:[#allocation2 + $0x2c]]
    %v298 = vstv %s297
    %v299 = vmul.f32 %v298, %v58
    %301 = vrot.lane.b32.xlu0 %v299, 86
    %v302 = vpop.permute.xlu0 %301
    %v303 = vrot.slane %v302, 1
    %v304 = vsel %vm283, %v302, %v303
    %v306 = vadd.f32 %v275, %v304
    %s307 = scalar_lea.vmem %s0, 1
    %v308 = vld [vmem:[%s307] ss:$2 sm:$0x7]
    %s309 = sld [smem:[#allocation2 + $0x9]]
    %v310 = vstv %s309
    %v311 = vmul.f32 %v310, %v308
    %v312 = vadd.f32 %v286, %v311
    %s313 = sld [smem:[#allocation2 + $0x1b]]
    %v314 = vstv %s313
    %v315 = vmul.f32 %v314, %v308
    %v316 = vadd.f32 %v296, %v315
    %s317 = sld [smem:[#allocation2 + $0x2d]]
    %v318 = vstv %s317
    %v319 = vmul.f32 %v318, %v308
    %v320 = vadd.f32 %v306, %v319
    %v321 = vld [vmem:[%s307] ss:$2 sm:$0xf]
    %s322 = sld [smem:[#allocation2 + $0xa]]
    %v323 = vstv %s322
    %v324 = vmul.f32 %v323, %v321
    %326 = vrot.lane.b32.xlu0 %v324, 127
    %v327 = vpop.permute.xlu0 %326
    %v328 = vrot.slane %v327, 1
    %v329 = vsel %vm66, %v327, %v328
    %v331 = vadd.f32 %v312, %v329
    %s332 = sld [smem:[#allocation2 + $0x1c]]
    %v333 = vstv %s332
    %v334 = vmul.f32 %v333, %v321
    %336 = vrot.lane.b32.xlu0 %v334, 127
    %v337 = vpop.permute.xlu0 %336
    %v338 = vrot.slane %v337, 1
    %v339 = vsel %vm66, %v337, %v338
    %v341 = vadd.f32 %v316, %v339
    %s342 = sld [smem:[#allocation2 + $0x2e]]
    %v343 = vstv %s342
    %v344 = vmul.f32 %v343, %v321
    %346 = vrot.lane.b32.xlu0 %v344, 127
    %v347 = vpop.permute.xlu0 %346
    %v348 = vrot.slane %v347, 1
    %v349 = vsel %vm66, %v347, %v348
    %v351 = vadd.f32 %v320, %v349
    %s352 = sld [smem:[#allocation2 + $0xb]]
    %v353 = vstv %s352
    %v354 = vmul.f32 %v353, %v321
    %356 = vrot.lane.b32.xlu0 %v354, 126
    %v357 = vpop.permute.xlu0 %356
    %v358 = vrot.slane %v357, 1
    %v359 = vsel %vm97, %v357, %v358
    %v361 = vadd.f32 %v331, %v359
    %s362 = sld [smem:[#allocation2 + $0x1d]]
    %v363 = vstv %s362
    %v364 = vmul.f32 %v363, %v321
    %366 = vrot.lane.b32.xlu0 %v364, 126
    %v367 = vpop.permute.xlu0 %366
    %v368 = vrot.slane %v367, 1
    %v369 = vsel %vm97, %v367, %v368
    %v371 = vadd.f32 %v341, %v369
    %s372 = sld [smem:[#allocation2 + $0x2f]]
    %v373 = vstv %s372
    %v374 = vmul.f32 %v373, %v321
    %376 = vrot.lane.b32.xlu0 %v374, 126
    %v377 = vpop.permute.xlu0 %376
    %v378 = vrot.slane %v377, 1
    %v379 = vsel %vm97, %v377, %v378
    %v381 = vadd.f32 %v351, %v379
    %s382 = sld [smem:[#allocation2 + $0xc]]
    %v383 = vstv %s382
    %v384 = vmul.f32 %v383, %v321
    %386 = vrot.lane.b32.xlu0 %v384, 108
    %v387 = vpop.permute.xlu0 %386
    %v388 = vrot.slane %v387, 1
    %v389 = vsel %vm128, %v387, %v388
    %v391 = vadd.f32 %v361, %v389
    %s392 = sld [smem:[#allocation2 + $0x1e]]
    %v393 = vstv %s392
    %v394 = vmul.f32 %v393, %v321
    %396 = vrot.lane.b32.xlu0 %v394, 108
    %v397 = vpop.permute.xlu0 %396
    %v398 = vrot.slane %v397, 1
    %v399 = vsel %vm128, %v397, %v398
    %v401 = vadd.f32 %v371, %v399
    %s402 = sld [smem:[#allocation2 + $0x30]]
    %v403 = vstv %s402
    %v404 = vmul.f32 %v403, %v321
    %406 = vrot.lane.b32.xlu0 %v404, 108
    %v407 = vpop.permute.xlu0 %406
    %v408 = vrot.slane %v407, 1
    %v409 = vsel %vm128, %v407, %v408
    %v411 = vadd.f32 %v381, %v409
    %s412 = sld [smem:[#allocation2 + $0xd]]
    %v413 = vstv %s412
    %v414 = vmul.f32 %v413, %v321
    %416 = vrot.lane.b32.xlu0 %v414, 107
    %v417 = vpop.permute.xlu0 %416
    %v418 = vrot.slane %v417, 1
    %v419 = vsel %vm159, %v417, %v418
    %v421 = vadd.f32 %v391, %v419
    %s422 = sld [smem:[#allocation2 + $0x1f]]
    %v423 = vstv %s422
    %v424 = vmul.f32 %v423, %v321
    %426 = vrot.lane.b32.xlu0 %v424, 107
    %v427 = vpop.permute.xlu0 %426
    %v428 = vrot.slane %v427, 1
    %v429 = vsel %vm159, %v427, %v428
    %v431 = vadd.f32 %v401, %v429
    %s432 = sld [smem:[#allocation2 + $0x31]]
    %v433 = vstv %s432
    %v434 = vmul.f32 %v433, %v321
    %436 = vrot.lane.b32.xlu0 %v434, 107
    %v437 = vpop.permute.xlu0 %436
    %v438 = vrot.slane %v437, 1
    %v439 = vsel %vm159, %v437, %v438
    %v441 = vadd.f32 %v411, %v439
    %s442 = sld [smem:[#allocation2 + $0xe]]
    %v443 = vstv %s442
    %v444 = vmul.f32 %v443, %v321
    %446 = vrot.lane.b32.xlu0 %v444, 106
    %v447 = vpop.permute.xlu0 %446
    %v448 = vrot.slane %v447, 1
    %v449 = vsel %vm190, %v447, %v448
    %v451 = vadd.f32 %v421, %v449
    %s452 = sld [smem:[#allocation2 + $0x20]]
    %v453 = vstv %s452
    %v454 = vmul.f32 %v453, %v321
    %456 = vrot.lane.b32.xlu0 %v454, 106
    %v457 = vpop.permute.xlu0 %456
    %v458 = vrot.slane %v457, 1
    %v459 = vsel %vm190, %v457, %v458
    %v461 = vadd.f32 %v431, %v459
    %s462 = sld [smem:[#allocation2 + $0x32]]
    %v463 = vstv %s462
    %v464 = vmul.f32 %v463, %v321
    %466 = vrot.lane.b32.xlu0 %v464, 106
    %v467 = vpop.permute.xlu0 %466
    %v468 = vrot.slane %v467, 1
    %v469 = vsel %vm190, %v467, %v468
    %v471 = vadd.f32 %v441, %v469
    %s472 = sld [smem:[#allocation2 + $0xf]]
    %v473 = vstv %s472
    %v474 = vmul.f32 %v473, %v321
    %476 = vrot.lane.b32.xlu0 %v474, 88
    %v477 = vpop.permute.xlu0 %476
    %v478 = vrot.slane %v477, 1
    %v479 = vsel %vm221, %v477, %v478
    %v481 = vadd.f32 %v451, %v479
    %s482 = sld [smem:[#allocation2 + $0x21]]
    %v483 = vstv %s482
    %v484 = vmul.f32 %v483, %v321
    %486 = vrot.lane.b32.xlu0 %v484, 88
    %v487 = vpop.permute.xlu0 %486
    %v488 = vrot.slane %v487, 1
    %v489 = vsel %vm221, %v487, %v488
    %v491 = vadd.f32 %v461, %v489
    %s492 = sld [smem:[#allocation2 + $0x33]]
    %v493 = vstv %s492
    %v494 = vmul.f32 %v493, %v321
    %496 = vrot.lane.b32.xlu0 %v494, 88
    %v497 = vpop.permute.xlu0 %496
    %v498 = vrot.slane %v497, 1
    %v499 = vsel %vm221, %v497, %v498
    %v501 = vadd.f32 %v471, %v499
    %s502 = sld [smem:[#allocation2 + $0x10]]
    %v503 = vstv %s502
    %v504 = vmul.f32 %v503, %v321
    %506 = vrot.lane.b32.xlu0 %v504, 87
    %v507 = vpop.permute.xlu0 %506
    %v508 = vrot.slane %v507, 1
    %v509 = vsel %vm252, %v507, %v508
    %v511 = vadd.f32 %v481, %v509
    %s512 = sld [smem:[#allocation2 + $0x22]]
    %v513 = vstv %s512
    %v514 = vmul.f32 %v513, %v321
    %516 = vrot.lane.b32.xlu0 %v514, 87
    %v517 = vpop.permute.xlu0 %516
    %v518 = vrot.slane %v517, 1
    %v519 = vsel %vm252, %v517, %v518
    %v521 = vadd.f32 %v491, %v519
    %s522 = sld [smem:[#allocation2 + $0x34]]
    %v523 = vstv %s522
    %v524 = vmul.f32 %v523, %v321
    %526 = vrot.lane.b32.xlu0 %v524, 87
    %v527 = vpop.permute.xlu0 %526
    %v528 = vrot.slane %v527, 1
    %v529 = vsel %vm252, %v527, %v528
    %v531 = vadd.f32 %v501, %v529
    %s532 = sld [smem:[#allocation2 + $0x11]]
    %v533 = vstv %s532
    %v534 = vmul.f32 %v533, %v321
    %536 = vrot.lane.b32.xlu0 %v534, 86
    %v537 = vpop.permute.xlu0 %536
    %v538 = vrot.slane %v537, 1
    %v539 = vsel %vm283, %v537, %v538
    %v541 = vadd.f32 %v511, %v539
    %s542 = sld [smem:[#allocation2 + $0x23]]
    %v543 = vstv %s542
    %v544 = vmul.f32 %v543, %v321
    %546 = vrot.lane.b32.xlu0 %v544, 86
    %v547 = vpop.permute.xlu0 %546
    %v548 = vrot.slane %v547, 1
    %v549 = vsel %vm283, %v547, %v548
    %v551 = vadd.f32 %v521, %v549
    %s552 = sld [smem:[#allocation2 + $0x35]]
    %v553 = vstv %s552
    %v554 = vmul.f32 %v553, %v321
    %556 = vrot.lane.b32.xlu0 %v554, 86
    %v557 = vpop.permute.xlu0 %556
    %v558 = vrot.slane %v557, 1
    %v559 = vsel %vm283, %v557, %v558
    %v561 = vadd.f32 %v531, %v559
    %v562 = vlaneseq
    %vm563 = vcmp.ge.s32.totalorder %v562, 0
    %vm564 = vcmp.lt.s32.totalorder %v562, 384
    %vm565 = vmand %vm563, %vm564
    %566 = vst.msk [vmem:[%s3] ss:$4 sm:$0x7] %vm565, %v541
    %s567 = scalar_lea.vmem %s3, 1
    %568 = vst.msk [vmem:[%s567] ss:$4 sm:$0x7] %vm565, %v551
    %s569 = scalar_lea.vmem %s3, 2
    %570 = vst.msk [vmem:[%s569] ss:$4 sm:$0x7] %vm565, %v561
    // Predicated region
    $region22: #{conv2d_pallas.1} parent=1 // pred_check
      _
    $region23: #{conv2d_pallas.1} parent=1 // pred_check_branch
      %572 = sbr.rel (0) target = $region25
    $region24: #{conv2d_pallas.1} parent=1 // pred_region
      _
    $region25: #{conv2d_pallas.1} parent=1 // pred_fallthru
      _
    // Predicated region
    $region26: #{conv2d_pallas.1} parent=1 // pred_check
      _
    $region27: #{conv2d_pallas.1} parent=1 // pred_check_branch
      %574 = sbr.rel (0) target = $region29
    $region28: #{conv2d_pallas.1} parent=1 // pred_region
      _
    $region29: #{conv2d_pallas.1} parent=1 // pred_fallthru
      _
    %575 = vsyncpa [#allocation3], 1
    %576 = vsyncpa [#allocation5], 1

</llo_original>
